<compile_context>
chip_gen: v6e
topology: v6e:2x2x1
jax: 0.10.0
libtpu: 0.0.40
codegen_flags: <defaults>
</compile_context>

<pallas_src>
import functools

import jax
import jax.numpy as jnp
from jax.experimental import pallas as pl
from jax.experimental.pallas import tpu as pltpu

INPUT_DIM = 40
HIDDEN_DIM = 128
OUTPUT_DIM = 10
LANE = 128      # TPU lane width: pad minor dims to multiples of this.
SUBLANE = 8     # f32 sublane count: batch tiles must be multiples of this.


def mlp_kernel(x_ref, w1_ref, b1_ref, w2_ref, b2_ref, w3_ref, b3_ref, o_ref):
    # Layer 1: [tb, in_pad](bf16) @ [in_pad, hid](bf16) -> f32 acc, bias + ReLU in f32.
    h1 = jnp.dot(x_ref[...], w1_ref[...], preferred_element_type=jnp.float32)
    h1 = jnp.maximum(h1 + b1_ref[...], 0.0)
    # Layer 2: cast activation to bf16 for the MXU, keep f32 accumulation.
    h2 = jnp.dot(h1.astype(jnp.bfloat16), w2_ref[...],
                 preferred_element_type=jnp.float32)
    h2 = jnp.maximum(h2 + b2_ref[...], 0.0)
    # Layer 3: lane-dense padded output (out_pad = 128), unmasked store.
    out = jnp.dot(h2.astype(jnp.bfloat16), w3_ref[...],
                  preferred_element_type=jnp.float32)
    o_ref[...] = (out + b3_ref[...]).astype(o_ref.dtype)


@functools.partial(jax.jit, static_argnames=("max_block_b",))
def causal_mlp_forward(x, w1, b1, w2, b2, w3, b3, *, max_block_b=256):
    """x: [B, in_dim] f32.  w*: [in, out] f32 (pre-transposed).  b*: [1, out] f32."""
    B, in_dim = x.shape
    hid = w1.shape[1]
    out_dim = w3.shape[1]

    # Pad feature / output axes to full lanes.
    in_pad = pl.cdiv(in_dim, LANE) * LANE
    out_pad = pl.cdiv(out_dim, LANE) * LANE

    # Adaptive batch tile: multiple of the sublane count, capped at max_block_b,
    # then pad the batch up to a whole number of tiles.
    block_b = min(max_block_b, pl.cdiv(B, SUBLANE) * SUBLANE)
    b_pad = pl.cdiv(B, block_b) * block_b

    bf16 = jnp.bfloat16
    xp = jnp.zeros((b_pad, in_pad), bf16).at[:B, :in_dim].set(x.astype(bf16))
    w1p = jnp.zeros((in_pad, hid), bf16).at[:in_dim, :].set(w1.astype(bf16))
    w2p = w2.astype(bf16)
    w3p = jnp.zeros((hid, out_pad), bf16).at[:, :out_dim].set(w3.astype(bf16))
    b1p = b1.reshape(1, hid).astype(jnp.float32)
    b2p = b2.reshape(1, hid).astype(jnp.float32)
    b3p = jnp.zeros((1, out_pad), jnp.float32).at[:, :out_dim].set(
        b3.reshape(1, out_dim).astype(jnp.float32))

    grid = (b_pad // block_b,)

    # Weights / biases are small and identical every step -> resident in VMEM.
    full = lambda r, c: pl.BlockSpec((r, c), lambda i: (0, 0))

    out_padded = pl.pallas_call(
        mlp_kernel,
        out_shape=jax.ShapeDtypeStruct((b_pad, out_pad), jnp.float32),
        grid_spec=pltpu.PrefetchScalarGridSpec(
            num_scalar_prefetch=0,
            grid=grid,
            in_specs=[
                pl.BlockSpec((block_b, in_pad), lambda i: (i, 0)),  # x tile (bf16)
                full(in_pad, hid),    # w1 (bf16)
                full(1, hid),         # b1 (f32)
                full(hid, hid),       # w2 (bf16)
                full(1, hid),         # b2 (f32)
                full(hid, out_pad),   # w3 (bf16, padded cols)
                full(1, out_pad),     # b3 (f32, padded cols)
            ],
            out_specs=pl.BlockSpec((block_b, out_pad), lambda i: (i, 0)),
        ),
        compiler_params=pltpu.CompilerParams(
            dimension_semantics=("parallel",),
        ),
    )(xp, w1p, b1p, w2p, b2p, w3p, b3p)

    # Drop batch padding and the padded output lanes.
    return out_padded[:B, :out_dim]


def init_linear_params(key, in_features, out_features):
    """Deterministic init mimicking torch.nn.Linear (uniform +/- 1/sqrt(in))."""
    kw, kb = jax.random.split(key)
    bound = 1.0 / jnp.sqrt(jnp.float32(in_features))
    # Stored already transposed: [in_features, out_features]
    w = jax.random.uniform(kw, (in_features, out_features), jnp.float32,
                           minval=-bound, maxval=bound)
    b = jax.random.uniform(kb, (1, out_features), jnp.float32,
                           minval=-bound, maxval=bound)
    return w, b


def reference_forward_f32(x, w1, b1, w2, b2, w3, b3):
    h1 = jnp.maximum(x @ w1 + b1, 0.0)
    h2 = jnp.maximum(h1 @ w2 + b2, 0.0)
    return h2 @ w3 + b3


def reference_forward_bf16(x, w1, b1, w2, b2, w3, b3):
    """Same bf16-operand / f32-accumulate path as the kernel, in plain JAX."""
    bf = jnp.bfloat16
    h1 = jnp.dot(x.astype(bf), w1.astype(bf), preferred_element_type=jnp.float32) + b1
    h1 = jnp.maximum(h1, 0.0)
    h2 = jnp.dot(h1.astype(bf), w2.astype(bf), preferred_element_type=jnp.float32) + b2
    h2 = jnp.maximum(h2, 0.0)
    return jnp.dot(h2.astype(bf), w3.astype(bf), preferred_element_type=jnp.float32) + b3


if __name__ == "__main__":
    key = jax.random.PRNGKey(0)
    kx, k1, k2, k3 = jax.random.split(key, 4)

    batch = 16
    x = jax.random.normal(kx, (batch, INPUT_DIM), jnp.float32)

    w1, b1 = init_linear_params(k1, INPUT_DIM, HIDDEN_DIM)
    w2, b2 = init_linear_params(k2, HIDDEN_DIM, HIDDEN_DIM)
    w3, b3 = init_linear_params(k3, HIDDEN_DIM, OUTPUT_DIM)

    out = causal_mlp_forward(x, w1, b1, w2, b2, w3, b3)
    out = jax.block_until_ready(out)

    assert out.shape == (batch, OUTPUT_DIM)

    # Exact-path check: kernel vs a JAX reference using the identical bf16/f32 recipe.
    ref_bf16 = reference_forward_bf16(x, w1, b1, w2, b2, w3, b3)
    assert jnp.allclose(out, ref_bf16, atol=1e-3, rtol=1e-3), "mismatch vs bf16 reference"

    # Sanity check: bf16 MXU operands stay close to the full-f32 math.
    ref_f32 = reference_forward_f32(x, w1, b1, w2, b2, w3, b3)
    assert jnp.allclose(out, ref_f32, atol=3e-2, rtol=3e-2), "mismatch vs f32 reference"

    # Exercise a multi-tile batch too (makes sure the grid path is taken).
    big_x = jax.random.normal(kx, (1000, INPUT_DIM), jnp.float32)
    big_out = jax.block_until_ready(
        causal_mlp_forward(big_x, w1, b1, w2, b2, w3, b3))
    big_ref = reference_forward_bf16(big_x, w1, b1, w2, b2, w3, b3)
    assert big_out.shape == (1000, OUTPUT_DIM)
    assert jnp.allclose(big_out, big_ref, atol=1e-3, rtol=1e-3), "multi-tile mismatch"

    print("KERNEL_OK")
</pallas_src>

<mosaic_0001>
module attributes {stable_mosaic.version = 11 : i64} {
  func.func @mlp_kernel(%arg0: i32, %arg1: memref<16x128xbf16, #tpu.memory_space<vmem>>, %arg2: memref<128x128xbf16, #tpu.memory_space<vmem>>, %arg3: memref<1x128xf32, #tpu.memory_space<vmem>>, %arg4: memref<128x128xbf16, #tpu.memory_space<vmem>>, %arg5: memref<1x128xf32, #tpu.memory_space<vmem>>, %arg6: memref<128x128xbf16, #tpu.memory_space<vmem>>, %arg7: memref<1x128xf32, #tpu.memory_space<vmem>>, %arg8: memref<16x128xf32, #tpu.memory_space<vmem>>) attributes {dimension_semantics = [#tpu.dimension_semantics<parallel>], iteration_bounds = array<i64: 1>, scalar_prefetch = 0 : i64, scratch_operands = 0 : i64, tpu.core_type = #tpu.core_type<tc>, window_params = [{transform_indices = @transform_0, window_bounds = array<i64: 16, 128>}, {pipeline_mode = #tpu.pipeline_mode<synchronous>, transform_indices = @transform_1, window_bounds = array<i64: 128, 128>}, {pipeline_mode = #tpu.pipeline_mode<synchronous>, transform_indices = @transform_2, window_bounds = array<i64: 1, 128>}, {pipeline_mode = #tpu.pipeline_mode<synchronous>, transform_indices = @transform_3, window_bounds = array<i64: 128, 128>}, {pipeline_mode = #tpu.pipeline_mode<synchronous>, transform_indices = @transform_4, window_bounds = array<i64: 1, 128>}, {pipeline_mode = #tpu.pipeline_mode<synchronous>, transform_indices = @transform_5, window_bounds = array<i64: 128, 128>}, {pipeline_mode = #tpu.pipeline_mode<synchronous>, transform_indices = @transform_6, window_bounds = array<i64: 1, 128>}, {transform_indices = @transform_7, window_bounds = array<i64: 16, 128>}]} {
    %c0 = arith.constant 0 : index
    %c0_0 = arith.constant 0 : index
    %0 = vector.load %arg1[%c0, %c0_0] : memref<16x128xbf16, #tpu.memory_space<vmem>>, vector<16x128xbf16>
    %c0_1 = arith.constant 0 : index
    %c0_2 = arith.constant 0 : index
    %1 = vector.load %arg2[%c0_1, %c0_2] : memref<128x128xbf16, #tpu.memory_space<vmem>>, vector<128x128xbf16>
    %cst = arith.constant dense<0.000000e+00> : vector<16x128xf32>
    %2 = tpu.matmul %0, %1, %cst {dimension_numbers = #tpu.dot_dimension_numbers<[1], [0], [0], [1], [0, 0, 1, 1], [], []>} : vector<16x128xbf16>, vector<128x128xbf16>, vector<16x128xf32> -> vector<16x128xf32>
    %c0_3 = arith.constant 0 : index
    %c0_4 = arith.constant 0 : index
    %3 = vector.load %arg3[%c0_3, %c0_4] : memref<1x128xf32, #tpu.memory_space<vmem>>, vector<1x128xf32>
    %4 = vector.broadcast %3 : vector<1x128xf32> to vector<16x128xf32>
    %5 = arith.addf %2, %4 : vector<16x128xf32>
    %cst_5 = arith.constant 0.000000e+00 : f32
    %6 = vector.broadcast %cst_5 : f32 to vector<16x128xf32>
    %7 = arith.maximumf %5, %6 : vector<16x128xf32>
    %8 = arith.truncf %7 : vector<16x128xf32> to vector<16x128xbf16>
    %c0_6 = arith.constant 0 : index
    %c0_7 = arith.constant 0 : index
    %9 = vector.load %arg4[%c0_6, %c0_7] : memref<128x128xbf16, #tpu.memory_space<vmem>>, vector<128x128xbf16>
    %cst_8 = arith.constant dense<0.000000e+00> : vector<16x128xf32>
    %10 = tpu.matmul %8, %9, %cst_8 {dimension_numbers = #tpu.dot_dimension_numbers<[1], [0], [0], [1], [0, 0, 1, 1], [], []>} : vector<16x128xbf16>, vector<128x128xbf16>, vector<16x128xf32> -> vector<16x128xf32>
    %c0_9 = arith.constant 0 : index
    %c0_10 = arith.constant 0 : index
    %11 = vector.load %arg5[%c0_9, %c0_10] : memref<1x128xf32, #tpu.memory_space<vmem>>, vector<1x128xf32>
    %12 = vector.broadcast %11 : vector<1x128xf32> to vector<16x128xf32>
    %13 = arith.addf %10, %12 : vector<16x128xf32>
    %cst_11 = arith.constant 0.000000e+00 : f32
    %14 = vector.broadcast %cst_11 : f32 to vector<16x128xf32>
    %15 = arith.maximumf %13, %14 : vector<16x128xf32>
    %16 = arith.truncf %15 : vector<16x128xf32> to vector<16x128xbf16>
    %c0_12 = arith.constant 0 : index
    %c0_13 = arith.constant 0 : index
    %17 = vector.load %arg6[%c0_12, %c0_13] : memref<128x128xbf16, #tpu.memory_space<vmem>>, vector<128x128xbf16>
    %cst_14 = arith.constant dense<0.000000e+00> : vector<16x128xf32>
    %18 = tpu.matmul %16, %17, %cst_14 {dimension_numbers = #tpu.dot_dimension_numbers<[1], [0], [0], [1], [0, 0, 1, 1], [], []>} : vector<16x128xbf16>, vector<128x128xbf16>, vector<16x128xf32> -> vector<16x128xf32>
    %c0_15 = arith.constant 0 : index
    %c0_16 = arith.constant 0 : index
    %19 = vector.load %arg7[%c0_15, %c0_16] : memref<1x128xf32, #tpu.memory_space<vmem>>, vector<1x128xf32>
    %20 = vector.broadcast %19 : vector<1x128xf32> to vector<16x128xf32>
    %21 = arith.addf %18, %20 : vector<16x128xf32>
    %c0_17 = arith.constant 0 : index
    %c0_18 = arith.constant 0 : index
    %22 = vector.load %arg8[%c0_17, %c0_18] : memref<16x128xf32, #tpu.memory_space<vmem>>, vector<16x128xf32>
    tpu.vector_store %arg8[%c0_17, %c0_18], %21 {strides = array<i32>} : memref<16x128xf32, #tpu.memory_space<vmem>>, vector<16x128xf32>,
    return
  }
  func.func @transform_0(%arg0: i32) -> (i32, i32) {
    %c0_i32 = arith.constant 0 : i32
    %c0_i32_0 = arith.constant 0 : i32
    return %arg0, %c0_i32 : i32, i32
  }
  func.func @transform_1(%arg0: i32) -> (i32, i32) {
    %c0_i32 = arith.constant 0 : i32
    %c0_i32_0 = arith.constant 0 : i32
    %c0_i32_1 = arith.constant 0 : i32
    return %c0_i32, %c0_i32_0 : i32, i32
  }
  func.func @transform_2(%arg0: i32) -> (i32, i32) {
    %c0_i32 = arith.constant 0 : i32
    %c0_i32_0 = arith.constant 0 : i32
    %c0_i32_1 = arith.constant 0 : i32
    return %c0_i32, %c0_i32_0 : i32, i32
  }
  func.func @transform_3(%arg0: i32) -> (i32, i32) {
    %c0_i32 = arith.constant 0 : i32
    %c0_i32_0 = arith.constant 0 : i32
    %c0_i32_1 = arith.constant 0 : i32
    return %c0_i32, %c0_i32_0 : i32, i32
  }
  func.func @transform_4(%arg0: i32) -> (i32, i32) {
    %c0_i32 = arith.constant 0 : i32
    %c0_i32_0 = arith.constant 0 : i32
    %c0_i32_1 = arith.constant 0 : i32
    return %c0_i32, %c0_i32_0 : i32, i32
  }
  func.func @transform_5(%arg0: i32) -> (i32, i32) {
    %c0_i32 = arith.constant 0 : i32
    %c0_i32_0 = arith.constant 0 : i32
    %c0_i32_1 = arith.constant 0 : i32
    return %c0_i32, %c0_i32_0 : i32, i32
  }
  func.func @transform_6(%arg0: i32) -> (i32, i32) {
    %c0_i32 = arith.constant 0 : i32
    %c0_i32_0 = arith.constant 0 : i32
    %c0_i32_1 = arith.constant 0 : i32
    return %c0_i32, %c0_i32_0 : i32, i32
  }
  func.func @transform_7(%arg0: i32) -> (i32, i32) {
    %c0_i32 = arith.constant 0 : i32
    %c0_i32_0 = arith.constant 0 : i32
    return %arg0, %c0_i32 : i32, i32
  }
}

</mosaic_0001>

<llo_original>
// kernel: causal_mlp_forward.1
$region0: #{causal_mlp_forward.1}
  #allocation0 [shape = 'u32[]', space=smem, size = 0x4, offset = 0x4, fixed_abs, tag = 'smem constant byte address 0x4 - core index']
  #allocation1 [shape = 'u32[144,128]{1,0:T(1,128)}', space=vmem, size = 0x12000, scoped, tag = 'internal scratch']
  %s0 = inlined_call_operand.vmem [shape: bf16[16,128], index: 0, kind: input, shape index: {}]
  %s1 = inlined_call_operand.vmem [shape: bf16[128,128], index: 1, kind: input, shape index: {}]
  %s2 = inlined_call_operand.vmem [shape: f32[1,128], index: 2, kind: input, shape index: {}]
  %s3 = inlined_call_operand.vmem [shape: bf16[128,128], index: 3, kind: input, shape index: {}]
  %s4 = inlined_call_operand.vmem [shape: f32[1,128], index: 4, kind: input, shape index: {}]
  %s5 = inlined_call_operand.vmem [shape: bf16[128,128], index: 5, kind: input, shape index: {}]
  %s6 = inlined_call_operand.vmem [shape: f32[1,128], index: 6, kind: input, shape index: {}]
  %s7 = inlined_call_operand.hbm [shape: f32[16,128], index: 7, kind: output, shape index: {}]
  %s8 = sld [smem:[#allocation0]]
  $region38: #{causal_mlp_forward.1} parent=0
    _
  %s10 = ssub.s32 1, %s8
  %s11 = scalar_select 0, %s10, %s8
  $region1: #{causal_mlp_forward.1} parent=0
    #allocation2 [shape = 'u8[8192]{0}', space=vmem, size = 0x2000, scoped, tag = 'output window, operand 0, single buffered']
    #allocation3 [shape = 's32[1]{0}', space=sflag, size = 0x4, scoped, tag = 'scoped memory for causal_mlp_forward.1']
    %12 = vsyncpa [#allocation3], 0
    // Predicated region
    $region2: #{causal_mlp_forward.1} parent=1 // pred_check
      _
    $region3: #{causal_mlp_forward.1} parent=1 // pred_check_branch
      %14 = sbr.rel (0) target = $region5
    $region4: #{causal_mlp_forward.1} parent=1 // pred_region
      _
    $region5: #{causal_mlp_forward.1} parent=1 // pred_fallthru
      _
    // Predicated region
    $region6: #{causal_mlp_forward.1} parent=1 // pred_check
      _
    $region7: #{causal_mlp_forward.1} parent=1 // pred_check_branch
      %16 = sbr.rel (0) target = $region9
    $region8: #{causal_mlp_forward.1} parent=1 // pred_region
      _
    $region9: #{causal_mlp_forward.1} parent=1 // pred_fallthru
      _
    // Predicated region
    $region10: #{causal_mlp_forward.1} parent=1 // pred_check
      _
    $region11: #{causal_mlp_forward.1} parent=1 // pred_check_branch
      %18 = sbr.rel (0) target = $region13
    $region12: #{causal_mlp_forward.1} parent=1 // pred_region
      _
    $region13: #{causal_mlp_forward.1} parent=1 // pred_fallthru
      _
    // Predicated region
    $region14: #{causal_mlp_forward.1} parent=1 // pred_check
      _
    $region15: #{causal_mlp_forward.1} parent=1 // pred_check_branch
      %20 = sbr.rel (0) target = $region17
    $region16: #{causal_mlp_forward.1} parent=1 // pred_region
      _
    $region17: #{causal_mlp_forward.1} parent=1 // pred_fallthru
      _
    // Predicated region
    $region18: #{causal_mlp_forward.1} parent=1 // pred_check
      _
    $region19: #{causal_mlp_forward.1} parent=1 // pred_check_branch
      %22 = sbr.rel (0) target = $region21
    $region20: #{causal_mlp_forward.1} parent=1 // pred_region
      _
    $region21: #{causal_mlp_forward.1} parent=1 // pred_fallthru
      _
    // Predicated region
    $region22: #{causal_mlp_forward.1} parent=1 // pred_check
      _
    $region23: #{causal_mlp_forward.1} parent=1 // pred_check_branch
      %24 = sbr.rel (0) target = $region25
    $region24: #{causal_mlp_forward.1} parent=1 // pred_region
      _
    $region25: #{causal_mlp_forward.1} parent=1 // pred_fallthru
      _
    // Predicated region
    $region26: #{causal_mlp_forward.1} parent=1 // pred_check
      _
    $region27: #{causal_mlp_forward.1} parent=1 // pred_check_branch
      %26 = sbr.rel (0) target = $region29
    $region28: #{causal_mlp_forward.1} parent=1 // pred_region
      _
    $region29: #{causal_mlp_forward.1} parent=1 // pred_fallthru
      _
    %v28 = vld [vmem:[%s0] sm:$0xf]
    %v29 = vld [vmem:[%s0 + $0x4] sm:$0xf]
    %v30 = vld [vmem:[%s1] sm:$0xf]
    %v31 = vld [vmem:[%s1 + $0x4] sm:$0xf]
    %v32 = vld [vmem:[%s1 + $0x8] sm:$0xf]
    %v33 = vld [vmem:[%s1 + $0xc] sm:$0xf]
    %v34 = vld [vmem:[%s1 + $0x10] sm:$0xf]
    %v35 = vld [vmem:[%s1 + $0x14] sm:$0xf]
    %v36 = vld [vmem:[%s1 + $0x18] sm:$0xf]
    %v37 = vld [vmem:[%s1 + $0x1c] sm:$0xf]
    %v38 = vld [vmem:[%s1 + $0x20] sm:$0xf]
    %v39 = vld [vmem:[%s1 + $0x24] sm:$0xf]
    %v40 = vld [vmem:[%s1 + $0x28] sm:$0xf]
    %v41 = vld [vmem:[%s1 + $0x2c] sm:$0xf]
    %v42 = vld [vmem:[%s1 + $0x30] sm:$0xf]
    %v43 = vld [vmem:[%s1 + $0x34] sm:$0xf]
    %v44 = vld [vmem:[%s1 + $0x38] sm:$0xf]
    %v45 = vld [vmem:[%s1 + $0x3c] sm:$0xf]
    %v46 = vld [vmem:[%s2] sm:$0x1]
    %v48 = vlaneseq
    %v49 = vshrl.u32 %v48, 7
    %v50 = vsub.s32 0, %v49
    %v51 = vrot.slane %v46, %v50
    %v55 = vunpack.c.l.b16 %v28
    %v56 = vunpack.c.l.b16 %v29
    %v57 = vpack.c.b16 %v56, %v55
    %v75 = vunpack.c.l.b16 %v30
    %v76 = vunpack.c.l.b16 %v31
    %v77 = vunpack.c.l.b16 %v32
    %v78 = vunpack.c.l.b16 %v33
    %v79 = vunpack.c.l.b16 %v34
    %v80 = vunpack.c.l.b16 %v35
    %v81 = vunpack.c.l.b16 %v36
    %v82 = vunpack.c.l.b16 %v37
    %v83 = vunpack.c.l.b16 %v38
    %v84 = vunpack.c.l.b16 %v39
    %v85 = vunpack.c.l.b16 %v40
    %v86 = vunpack.c.l.b16 %v41
    %v87 = vunpack.c.l.b16 %v42
    %v88 = vunpack.c.l.b16 %v43
    %v89 = vunpack.c.l.b16 %v44
    %v90 = vunpack.c.l.b16 %v45
    %v91 = vpack.c.b16 %v76, %v75
    %v92 = vpack.c.b16 %v78, %v77
    %v93 = vpack.c.b16 %v80, %v79
    %v94 = vpack.c.b16 %v82, %v81
    %v95 = vpack.c.b16 %v84, %v83
    %v96 = vpack.c.b16 %v86, %v85
    %v97 = vpack.c.b16 %v88, %v87
    %v98 = vpack.c.b16 %v90, %v89
    %107 = vmatprep.subr.bf16.mxu0 0
    %108 = vmatpush1.bf16.msra.mxu0 %v98
    %109 = vmatprep.subr.bf16.mxu0 0
    %110 = vmatpush1.bf16.msra.mxu0 %v97
    %111 = vmatprep.subr.bf16.mxu0 0
    %112 = vmatpush1.bf16.msra.mxu0 %v96
    %113 = vmatprep.subr.bf16.mxu0 0
    %114 = vmatpush1.bf16.msra.mxu0 %v95
    %115 = vmatprep.subr.bf16.mxu0 0
    %116 = vmatpush1.bf16.msra.mxu0 %v94
    %117 = vmatprep.subr.bf16.mxu0 0
    %118 = vmatpush1.bf16.msra.mxu0 %v93
    %119 = vmatprep.subr.bf16.mxu0 0
    %120 = vmatpush1.bf16.msra.mxu0 %v92
    %121 = vmatprep.subr.bf16.mxu0 0
    %122 = vmatpush1.bf16.msra.mxu0 %v91
    %123 = vmatprep.subr.bf16.mxu0 0
    %124 = vmatpush2.bf16.msra.mxu0 0
    %125 = vmatprep.subr.bf16.mxu0 0
    %126 = vmatpush2.bf16.msra.mxu0 0
    %127 = vmatprep.subr.bf16.mxu0 0
    %128 = vmatpush2.bf16.msra.mxu0 0
    %129 = vmatprep.subr.bf16.mxu0 0
    %130 = vmatpush2.bf16.msra.mxu0 0
    %131 = vmatprep.subr.bf16.mxu0 0
    %132 = vmatpush2.bf16.msra.mxu0 0
    %133 = vmatprep.subr.bf16.mxu0 0
    %134 = vmatpush2.bf16.msra.mxu0 0
    %135 = vmatprep.subr.bf16.mxu0 0
    %136 = vmatpush2.bf16.msra.mxu0 0
    %137 = vmatprep.subr.bf16.mxu0 0
    %138 = vmatpush2.bf16.msra.mxu0 0
    %139 = vmatprep.mubr.bf16.mxu0 0
    %140 = vmatmul.mubr.bf16.gmra.mxu0 %v57
    %v141 = vpop.f32.mrf.mxu0
    %v142 = vadd.f32 %v51, %v141
    %v143 = vpop.f32.mrf.mxu0
    %v144 = vpop.f32.mrf.mxu0
    %v145 = vadd.f32 %v51, %v144
    %v146 = vpop.f32.mrf.mxu0
    %147 = vdwg.mxu0
    %v148 = vmax.f32 %v142, 0.0
    %v149 = vmax.f32 %v145, 0.0
    %v150 = vpack.c.bf16 %v149, %v148
    %v151 = vld [vmem:[%s3] sm:$0xf]
    %v152 = vld [vmem:[%s3 + $0x4] sm:$0xf]
    %v153 = vld [vmem:[%s3 + $0x8] sm:$0xf]
    %v154 = vld [vmem:[%s3 + $0xc] sm:$0xf]
    %v155 = vld [vmem:[%s3 + $0x10] sm:$0xf]
    %v156 = vld [vmem:[%s3 + $0x14] sm:$0xf]
    %v157 = vld [vmem:[%s3 + $0x18] sm:$0xf]
    %v158 = vld [vmem:[%s3 + $0x1c] sm:$0xf]
    %v159 = vld [vmem:[%s3 + $0x20] sm:$0xf]
    %v160 = vld [vmem:[%s3 + $0x24] sm:$0xf]
    %v161 = vld [vmem:[%s3 + $0x28] sm:$0xf]
    %v162 = vld [vmem:[%s3 + $0x2c] sm:$0xf]
    %v163 = vld [vmem:[%s3 + $0x30] sm:$0xf]
    %v164 = vld [vmem:[%s3 + $0x34] sm:$0xf]
    %v165 = vld [vmem:[%s3 + $0x38] sm:$0xf]
    %v166 = vld [vmem:[%s3 + $0x3c] sm:$0xf]
    %v167 = vld [vmem:[%s4] sm:$0x1]
    %v169 = vlaneseq
    %v170 = vshrl.u32 %v169, 7
    %v171 = vsub.s32 0, %v170
    %v172 = vrot.slane %v167, %v171
    %v190 = vunpack.c.l.b16 %v151
    %v191 = vunpack.c.l.b16 %v152
    %v192 = vunpack.c.l.b16 %v153
    %v193 = vunpack.c.l.b16 %v154
    %v194 = vunpack.c.l.b16 %v155
    %v195 = vunpack.c.l.b16 %v156
    %v196 = vunpack.c.l.b16 %v157
    %v197 = vunpack.c.l.b16 %v158
    %v198 = vunpack.c.l.b16 %v159
    %v199 = vunpack.c.l.b16 %v160
    %v200 = vunpack.c.l.b16 %v161
    %v201 = vunpack.c.l.b16 %v162
    %v202 = vunpack.c.l.b16 %v163
    %v203 = vunpack.c.l.b16 %v164
    %v204 = vunpack.c.l.b16 %v165
    %v205 = vunpack.c.l.b16 %v166
    %v206 = vpack.c.b16 %v191, %v190
    %v207 = vpack.c.b16 %v193, %v192
    %v208 = vpack.c.b16 %v195, %v194
    %v209 = vpack.c.b16 %v197, %v196
    %v210 = vpack.c.b16 %v199, %v198
    %v211 = vpack.c.b16 %v201, %v200
    %v212 = vpack.c.b16 %v203, %v202
    %v213 = vpack.c.b16 %v205, %v204
    %222 = vmatprep.subr.bf16.mxu0 0
    %223 = vmatpush1.bf16.msra.mxu0 %v213
    %224 = vmatprep.subr.bf16.mxu0 0
    %225 = vmatpush1.bf16.msra.mxu0 %v212
    %226 = vmatprep.subr.bf16.mxu0 0
    %227 = vmatpush1.bf16.msra.mxu0 %v211
    %228 = vmatprep.subr.bf16.mxu0 0
    %229 = vmatpush1.bf16.msra.mxu0 %v210
    %230 = vmatprep.subr.bf16.mxu0 0
    %231 = vmatpush1.bf16.msra.mxu0 %v209
    %232 = vmatprep.subr.bf16.mxu0 0
    %233 = vmatpush1.bf16.msra.mxu0 %v208
    %234 = vmatprep.subr.bf16.mxu0 0
    %235 = vmatpush1.bf16.msra.mxu0 %v207
    %236 = vmatprep.subr.bf16.mxu0 0
    %237 = vmatpush1.bf16.msra.mxu0 %v206
    %238 = vmatprep.subr.bf16.mxu0 0
    %239 = vmatpush2.bf16.msra.mxu0 0
    %240 = vmatprep.subr.bf16.mxu0 0
    %241 = vmatpush2.bf16.msra.mxu0 0
    %242 = vmatprep.subr.bf16.mxu0 0
    %243 = vmatpush2.bf16.msra.mxu0 0
    %244 = vmatprep.subr.bf16.mxu0 0
    %245 = vmatpush2.bf16.msra.mxu0 0
    %246 = vmatprep.subr.bf16.mxu0 0
    %247 = vmatpush2.bf16.msra.mxu0 0
    %248 = vmatprep.subr.bf16.mxu0 0
    %249 = vmatpush2.bf16.msra.mxu0 0
    %250 = vmatprep.subr.bf16.mxu0 0
    %251 = vmatpush2.bf16.msra.mxu0 0
    %252 = vmatprep.subr.bf16.mxu0 0
    %253 = vmatpush2.bf16.msra.mxu0 0
    %254 = vmatprep.mubr.bf16.mxu0 0
    %255 = vmatmul.mubr.bf16.gmra.mxu0 %v150
    %v256 = vpop.f32.mrf.mxu0
    %v257 = vadd.f32 %v172, %v256
    %v258 = vpop.f32.mrf.mxu0
    %v259 = vpop.f32.mrf.mxu0
    %v260 = vadd.f32 %v172, %v259
    %v261 = vpop.f32.mrf.mxu0
    %262 = vdwg.mxu0
    %v263 = vmax.f32 %v257, 0.0
    %v264 = vmax.f32 %v260, 0.0
    %v265 = vpack.c.bf16 %v264, %v263
    %v266 = vld [vmem:[%s5] sm:$0xf]
    %v267 = vld [vmem:[%s5 + $0x4] sm:$0xf]
    %v268 = vld [vmem:[%s5 + $0x8] sm:$0xf]
    %v269 = vld [vmem:[%s5 + $0xc] sm:$0xf]
    %v270 = vld [vmem:[%s5 + $0x10] sm:$0xf]
    %v271 = vld [vmem:[%s5 + $0x14] sm:$0xf]
    %v272 = vld [vmem:[%s5 + $0x18] sm:$0xf]
    %v273 = vld [vmem:[%s5 + $0x1c] sm:$0xf]
    %v274 = vld [vmem:[%s5 + $0x20] sm:$0xf]
    %v275 = vld [vmem:[%s5 + $0x24] sm:$0xf]
    %v276 = vld [vmem:[%s5 + $0x28] sm:$0xf]
    %v277 = vld [vmem:[%s5 + $0x2c] sm:$0xf]
    %v278 = vld [vmem:[%s5 + $0x30] sm:$0xf]
    %v279 = vld [vmem:[%s5 + $0x34] sm:$0xf]
    %v280 = vld [vmem:[%s5 + $0x38] sm:$0xf]
    %v281 = vld [vmem:[%s5 + $0x3c] sm:$0xf]
    %v282 = vld [vmem:[%s6] sm:$0x1]
    %v284 = vlaneseq
    %v285 = vshrl.u32 %v284, 7
    %v286 = vsub.s32 0, %v285
    %v287 = vrot.slane %v282, %v286
    %v305 = vunpack.c.l.b16 %v266
    %v306 = vunpack.c.l.b16 %v267
    %v307 = vunpack.c.l.b16 %v268
    %v308 = vunpack.c.l.b16 %v269
    %v309 = vunpack.c.l.b16 %v270
    %v310 = vunpack.c.l.b16 %v271
    %v311 = vunpack.c.l.b16 %v272
    %v312 = vunpack.c.l.b16 %v273
    %v313 = vunpack.c.l.b16 %v274
    %v314 = vunpack.c.l.b16 %v275
    %v315 = vunpack.c.l.b16 %v276
    %v316 = vunpack.c.l.b16 %v277
    %v317 = vunpack.c.l.b16 %v278
    %v318 = vunpack.c.l.b16 %v279
    %v319 = vunpack.c.l.b16 %v280
    %v320 = vunpack.c.l.b16 %v281
    %v321 = vpack.c.b16 %v306, %v305
    %v322 = vpack.c.b16 %v308, %v307
    %v323 = vpack.c.b16 %v310, %v309
    %v324 = vpack.c.b16 %v312, %v311
    %v325 = vpack.c.b16 %v314, %v313
    %v326 = vpack.c.b16 %v316, %v315
    %v327 = vpack.c.b16 %v318, %v317
    %v328 = vpack.c.b16 %v320, %v319
    %337 = vmatprep.subr.bf16.mxu0 0
    %338 = vmatpush1.bf16.msra.mxu0 %v328
    %339 = vmatprep.subr.bf16.mxu0 0
    %340 = vmatpush1.bf16.msra.mxu0 %v327
    %341 = vmatprep.subr.bf16.mxu0 0
    %342 = vmatpush1.bf16.msra.mxu0 %v326
    %343 = vmatprep.subr.bf16.mxu0 0
    %344 = vmatpush1.bf16.msra.mxu0 %v325
    %345 = vmatprep.subr.bf16.mxu0 0
    %346 = vmatpush1.bf16.msra.mxu0 %v324
    %347 = vmatprep.subr.bf16.mxu0 0
    %348 = vmatpush1.bf16.msra.mxu0 %v323
    %349 = vmatprep.subr.bf16.mxu0 0
    %350 = vmatpush1.bf16.msra.mxu0 %v322
    %351 = vmatprep.subr.bf16.mxu0 0
    %352 = vmatpush1.bf16.msra.mxu0 %v321
    %353 = vmatprep.subr.bf16.mxu0 0
    %354 = vmatpush2.bf16.msra.mxu0 0
    %355 = vmatprep.subr.bf16.mxu0 0
    %356 = vmatpush2.bf16.msra.mxu0 0
    %357 = vmatprep.subr.bf16.mxu0 0
    %358 = vmatpush2.bf16.msra.mxu0 0
    %359 = vmatprep.subr.bf16.mxu0 0
    %360 = vmatpush2.bf16.msra.mxu0 0
    %361 = vmatprep.subr.bf16.mxu0 0
    %362 = vmatpush2.bf16.msra.mxu0 0
    %363 = vmatprep.subr.bf16.mxu0 0
    %364 = vmatpush2.bf16.msra.mxu0 0
    %365 = vmatprep.subr.bf16.mxu0 0
    %366 = vmatpush2.bf16.msra.mxu0 0
    %367 = vmatprep.subr.bf16.mxu0 0
    %368 = vmatpush2.bf16.msra.mxu0 0
    %369 = vmatprep.mubr.bf16.mxu0 0
    %370 = vmatmul.mubr.bf16.gmra.mxu0 %v265
    %v371 = vpop.f32.mrf.mxu0
    %v372 = vadd.f32 %v287, %v371
    %v373 = vpop.f32.mrf.mxu0
    %v374 = vpop.f32.mrf.mxu0
    %v375 = vadd.f32 %v287, %v374
    %v376 = vpop.f32.mrf.mxu0
    %377 = vdwg.mxu0
    %378 = vst [vmem:[#allocation2] sm:$0xff] %v372
    %379 = vst [vmem:[#allocation2 + $0x8] sm:$0xff] %v375
    // Predicated region
    $region30: #{causal_mlp_forward.1} parent=1 // pred_check
      _
    $region31: #{causal_mlp_forward.1} parent=1 // pred_check_branch
      %381 = sbr.rel (0) target = $region33
    $region32: #{causal_mlp_forward.1} parent=1 // pred_region
      %s383 = ssub.s32 256, 256
      %384 = vsyncadd [#allocation3], %s383
      %s385 = sshll.u32 [#allocation2], 4
      %s386 = int_to_ptr.vmem [resolvable:$true] %s385
      %391 = dma.vmem_to_hbm [thread:$0]  %s386, 256, %s7, [#allocation3], 128, 128, 8
    $region33: #{causal_mlp_forward.1} parent=1 // pred_fallthru
      _
    // Predicated region
    $region34: #{causal_mlp_forward.1} parent=1 // pred_check
      _
    $region35: #{causal_mlp_forward.1} parent=1 // pred_check_branch
      %393 = sbr.rel (0) target = $region37
    $region36: #{causal_mlp_forward.1} parent=1 // pred_region
      %394 = dma.done [#allocation3], 256
    $region37: #{causal_mlp_forward.1} parent=1 // pred_fallthru
      _
    %395 = vsyncpa [#allocation3], 1

</llo_original>
